<compile_context>
chip_gen: v6e
topology: v6e:2x2x1
jax: 0.10.0
libtpu: 0.0.40
codegen_flags: <defaults>
</compile_context>

<pallas_src>
import jax
import jax.numpy as jnp
from jax.experimental import pallas as pl
from jax.experimental.pallas import tpu as pltpu

IN_SHAPE = 1          # model in_shape
H1 = 64               # first hidden
H2 = 128              # second hidden
OUT_SHAPE = 3         # len(quantiles)
OUT_PAD = 8           # padded output sublanes (sliced back to 3 in wrapper)
TM_MAX = 4096         # max batch tile (lane multiple; sweepable 2048-8192)
LANE = 128


def _mlp_kernel(x_ref, w1_ref, b1_ref, w2_ref, b2_ref, w3_ref, b3_ref, o_ref):
    """Fused 3-layer MLP on one (1, TM) batch tile (batch on the lane axis)."""
    x = x_ref[...]                                              # (1, TM)
    # Layer 1: in_features == 1 -> outer product via VPU broadcast (no MXU).
    h1 = jnp.maximum(w1_ref[...] * x + b1_ref[...], 0.0)        # (64, TM)
    # Dropout (eval mode) == identity.
    h2 = jnp.maximum(
        jnp.dot(w2_ref[...], h1, preferred_element_type=jnp.float32)
        + b2_ref[...], 0.0)                                     # (128, TM)
    # Dropout (eval mode) == identity.
    o_ref[...] = (
        jnp.dot(w3_ref[...], h2, preferred_element_type=jnp.float32)
        + b3_ref[...])                                          # (8, TM)


def prepare_params(params):
    """One-time: reshape torch-layout weights for the transposed dataflow."""
    w1, b1, w2, b2, w3, b3 = params
    w1_c = jnp.asarray(w1, jnp.float32).reshape(H1, 1)          # (64, 1)
    b1_c = jnp.asarray(b1, jnp.float32).reshape(H1, 1)          # (64, 1)
    w2_c = jnp.asarray(w2, jnp.float32)                         # (128, 64) torch layout
    b2_c = jnp.asarray(b2, jnp.float32).reshape(H2, 1)          # (128, 1)
    w3_p = jnp.zeros((OUT_PAD, H2), jnp.float32).at[:OUT_SHAPE, :].set(
        jnp.asarray(w3, jnp.float32))                           # (8, 128)
    b3_p = jnp.zeros((OUT_PAD, 1), jnp.float32).at[:OUT_SHAPE, 0].set(
        jnp.asarray(b3, jnp.float32))                           # (8, 1)
    return (w1_c, b1_c, w2_c, b2_c, w3_p, b3_p)


@jax.jit
def q_model_forward(x, prepped):
    """x: (N, IN_SHAPE) float32 -> (N, OUT_SHAPE) float32."""
    w1_c, b1_c, w2_c, b2_c, w3_p, b3_p = prepped
    n = x.shape[0]

    # Batch tile: lane multiple, up to TM_MAX columns.
    n128 = ((n + LANE - 1) // LANE) * LANE
    tm = min(TM_MAX, n128)
    n_pad = ((n + tm - 1) // tm) * tm

    # Lane-dense input: (N,1) -> (1,N) is a free row-major reshape; pad only
    # when the tile does not divide N (4 B/element, cheap).
    x_row = x.astype(jnp.float32).reshape(1, n)
    if n_pad != n:
        x_row = jnp.pad(x_row, ((0, 0), (0, n_pad - n)))

    full = lambda i: (0, 0)

    out_t = pl.pallas_call(
        _mlp_kernel,
        out_shape=jax.ShapeDtypeStruct((OUT_PAD, n_pad), jnp.float32),
        grid_spec=pltpu.PrefetchScalarGridSpec(
            num_scalar_prefetch=0,
            grid=(n_pad // tm,),
            in_specs=[
                pl.BlockSpec((1, tm), lambda i: (0, i)),      # x (batch on lanes)
                pl.BlockSpec((H1, 1), full),                  # W1 column
                pl.BlockSpec((H1, 1), full),                  # b1
                pl.BlockSpec((H2, H1), full),                 # W2 (torch layout)
                pl.BlockSpec((H2, 1), full),                  # b2
                pl.BlockSpec((OUT_PAD, H2), full),            # W3 (sublane-padded)
                pl.BlockSpec((OUT_PAD, 1), full),             # b3 (sublane-padded)
            ],
            out_specs=pl.BlockSpec((OUT_PAD, tm), lambda i: (0, i)),
        ),
        compiler_params=pltpu.CompilerParams(
            dimension_semantics=("parallel",),
            vmem_limit_bytes=32 * 1024 * 1024,
        ),
    )(x_row, w1_c, b1_c, w2_c, b2_c, w3_p, b3_p)

    # (8, n_pad) lane-dense kernel output -> (n, 3) module-layout output.
    return out_t[:OUT_SHAPE, :n].T


# ----------------------------------------------------------------------------
# Deterministic parameter init (mirrors nn.init.orthogonal_ + zero bias).
# ----------------------------------------------------------------------------
def _orthogonal(key, shape):
    """Orthogonal init for a (rows, cols) matrix, torch-style semantics."""
    rows, cols = shape
    n_max, n_min = max(rows, cols), min(rows, cols)
    a = jax.random.normal(key, (n_max, n_min), dtype=jnp.float32)
    q, r = jnp.linalg.qr(a)
    q = q * jnp.sign(jnp.diag(r))[None, :]
    if rows < cols:
        q = q.T
    return q[:rows, :cols]


def init_params(key):
    k1, k2, k3 = jax.random.split(key, 3)
    w1 = _orthogonal(k1, (H1, IN_SHAPE))      # torch weight shape (out, in)
    b1 = jnp.zeros((H1,), jnp.float32)
    w2 = _orthogonal(k2, (H2, H1))
    b2 = jnp.zeros((H2,), jnp.float32)
    w3 = _orthogonal(k3, (OUT_SHAPE, H2))
    b3 = jnp.zeros((OUT_SHAPE,), jnp.float32)
    return (w1, b1, w2, b2, w3, b3)


def reference_forward(x, params):
    """Pure-JAX reference for correctness checking."""
    w1, b1, w2, b2, w3, b3 = params
    h = jnp.maximum(x @ w1.T + b1, 0.0)
    h = jnp.maximum(h @ w2.T + b2, 0.0)
    return h @ w3.T + b3


if __name__ == "__main__":
    key = jax.random.PRNGKey(0)
    pkey, xkey = jax.random.split(key)
    params = init_params(pkey)
    prepped = prepare_params(params)

    # Small batch (single tile, grid = 1, tm = 128).
    batch = 8
    x = jax.random.normal(xkey, (batch, IN_SHAPE), dtype=jnp.float32)
    out = jax.block_until_ready(q_model_forward(x, prepped))
    ref = reference_forward(x, params)
    assert out.shape == (batch, OUT_SHAPE), out.shape
    assert jnp.allclose(out, ref, atol=1e-4, rtol=1e-4), (
        f"max abs err {jnp.max(jnp.abs(out - ref))}"
    )

    # Larger ragged batch exercising multi-step grid (tm = 4096, grid = (3,)).
    batch2 = 8200
    x2 = jax.random.normal(jax.random.PRNGKey(1), (batch2, IN_SHAPE),
                           dtype=jnp.float32)
    out2 = jax.block_until_ready(q_model_forward(x2, prepped))
    ref2 = reference_forward(x2, params)
    assert out2.shape == (batch2, OUT_SHAPE), out2.shape
    assert jnp.allclose(out2, ref2, atol=1e-4, rtol=1e-4), (
        f"max abs err {jnp.max(jnp.abs(out2 - ref2))}"
    )

    print("KERNEL_OK")
</pallas_src>

<mosaic_0001>
module attributes {stable_mosaic.version = 11 : i64} {
  func.func @_mlp_kernel(%arg0: i32, %arg1: memref<1x128xf32, #tpu.memory_space<vmem>>, %arg2: memref<64x1xf32, #tpu.memory_space<vmem>>, %arg3: memref<64x1xf32, #tpu.memory_space<vmem>>, %arg4: memref<128x64xf32, #tpu.memory_space<vmem>>, %arg5: memref<128x1xf32, #tpu.memory_space<vmem>>, %arg6: memref<8x128xf32, #tpu.memory_space<vmem>>, %arg7: memref<8x1xf32, #tpu.memory_space<vmem>>, %arg8: memref<8x128xf32, #tpu.memory_space<vmem>>) attributes {dimension_semantics = [#tpu.dimension_semantics<parallel>], iteration_bounds = array<i64: 1>, scalar_prefetch = 0 : i64, scratch_operands = 0 : i64, tpu.core_type = #tpu.core_type<tc>, window_params = [{transform_indices = @transform_0, window_bounds = array<i64: 1, 128>}, {pipeline_mode = #tpu.pipeline_mode<synchronous>, transform_indices = @transform_1, window_bounds = array<i64: 64, 1>}, {pipeline_mode = #tpu.pipeline_mode<synchronous>, transform_indices = @transform_2, window_bounds = array<i64: 64, 1>}, {pipeline_mode = #tpu.pipeline_mode<synchronous>, transform_indices = @transform_3, window_bounds = array<i64: 128, 64>}, {pipeline_mode = #tpu.pipeline_mode<synchronous>, transform_indices = @transform_4, window_bounds = array<i64: 128, 1>}, {pipeline_mode = #tpu.pipeline_mode<synchronous>, transform_indices = @transform_5, window_bounds = array<i64: 8, 128>}, {pipeline_mode = #tpu.pipeline_mode<synchronous>, transform_indices = @transform_6, window_bounds = array<i64: 8, 1>}, {transform_indices = @transform_7, window_bounds = array<i64: 8, 128>}]} {
    %c0 = arith.constant 0 : index
    %c0_0 = arith.constant 0 : index
    %0 = vector.load %arg1[%c0, %c0_0] : memref<1x128xf32, #tpu.memory_space<vmem>>, vector<1x128xf32>
    %c0_1 = arith.constant 0 : index
    %c0_2 = arith.constant 0 : index
    %1 = vector.load %arg2[%c0_1, %c0_2] : memref<64x1xf32, #tpu.memory_space<vmem>>, vector<64x1xf32>
    %2 = vector.broadcast %1 : vector<64x1xf32> to vector<64x128xf32>
    %3 = vector.broadcast %0 : vector<1x128xf32> to vector<64x128xf32>
    %4 = arith.mulf %2, %3 : vector<64x128xf32>
    %c0_3 = arith.constant 0 : index
    %c0_4 = arith.constant 0 : index
    %5 = vector.load %arg3[%c0_3, %c0_4] : memref<64x1xf32, #tpu.memory_space<vmem>>, vector<64x1xf32>
    %6 = vector.broadcast %5 : vector<64x1xf32> to vector<64x128xf32>
    %7 = arith.addf %4, %6 : vector<64x128xf32>
    %cst = arith.constant 0.000000e+00 : f32
    %8 = vector.broadcast %cst : f32 to vector<64x128xf32>
    %9 = arith.maximumf %7, %8 : vector<64x128xf32>
    %c0_5 = arith.constant 0 : index
    %c0_6 = arith.constant 0 : index
    %10 = vector.load %arg4[%c0_5, %c0_6] : memref<128x64xf32, #tpu.memory_space<vmem>>, vector<128x64xf32>
    %cst_7 = arith.constant dense<0.000000e+00> : vector<128x128xf32>
    %11 = tpu.matmul %10, %9, %cst_7 {dimension_numbers = #tpu.dot_dimension_numbers<[1], [0], [0], [1], [0, 0, 1, 1], [], []>} : vector<128x64xf32>, vector<64x128xf32>, vector<128x128xf32> -> vector<128x128xf32>
    %c0_8 = arith.constant 0 : index
    %c0_9 = arith.constant 0 : index
    %12 = vector.load %arg5[%c0_8, %c0_9] : memref<128x1xf32, #tpu.memory_space<vmem>>, vector<128x1xf32>
    %13 = vector.broadcast %12 : vector<128x1xf32> to vector<128x128xf32>
    %14 = arith.addf %11, %13 : vector<128x128xf32>
    %cst_10 = arith.constant 0.000000e+00 : f32
    %15 = vector.broadcast %cst_10 : f32 to vector<128x128xf32>
    %16 = arith.maximumf %14, %15 : vector<128x128xf32>
    %c0_11 = arith.constant 0 : index
    %c0_12 = arith.constant 0 : index
    %17 = vector.load %arg6[%c0_11, %c0_12] : memref<8x128xf32, #tpu.memory_space<vmem>>, vector<8x128xf32>
    %cst_13 = arith.constant dense<0.000000e+00> : vector<8x128xf32>
    %18 = tpu.matmul %17, %16, %cst_13 {dimension_numbers = #tpu.dot_dimension_numbers<[1], [0], [0], [1], [0, 0, 1, 1], [], []>} : vector<8x128xf32>, vector<128x128xf32>, vector<8x128xf32> -> vector<8x128xf32>
    %c0_14 = arith.constant 0 : index
    %c0_15 = arith.constant 0 : index
    %19 = vector.load %arg7[%c0_14, %c0_15] : memref<8x1xf32, #tpu.memory_space<vmem>>, vector<8x1xf32>
    %20 = vector.broadcast %19 : vector<8x1xf32> to vector<8x128xf32>
    %21 = arith.addf %18, %20 : vector<8x128xf32>
    %c0_16 = arith.constant 0 : index
    %c0_17 = arith.constant 0 : index
    %22 = vector.load %arg8[%c0_16, %c0_17] : memref<8x128xf32, #tpu.memory_space<vmem>>, vector<8x128xf32>
    tpu.vector_store %arg8[%c0_16, %c0_17], %21 {strides = array<i32>} : memref<8x128xf32, #tpu.memory_space<vmem>>, vector<8x128xf32>,
    return
  }
  func.func @transform_0(%arg0: i32) -> (i32, i32) {
    %c0_i32 = arith.constant 0 : i32
    %c0_i32_0 = arith.constant 0 : i32
    return %c0_i32, %arg0 : i32, i32
  }
  func.func @transform_1(%arg0: i32) -> (i32, i32) {
    %c0_i32 = arith.constant 0 : i32
    %c0_i32_0 = arith.constant 0 : i32
    %c0_i32_1 = arith.constant 0 : i32
    return %c0_i32, %c0_i32_0 : i32, i32
  }
  func.func @transform_2(%arg0: i32) -> (i32, i32) {
    %c0_i32 = arith.constant 0 : i32
    %c0_i32_0 = arith.constant 0 : i32
    %c0_i32_1 = arith.constant 0 : i32
    return %c0_i32, %c0_i32_0 : i32, i32
  }
  func.func @transform_3(%arg0: i32) -> (i32, i32) {
    %c0_i32 = arith.constant 0 : i32
    %c0_i32_0 = arith.constant 0 : i32
    %c0_i32_1 = arith.constant 0 : i32
    return %c0_i32, %c0_i32_0 : i32, i32
  }
  func.func @transform_4(%arg0: i32) -> (i32, i32) {
    %c0_i32 = arith.constant 0 : i32
    %c0_i32_0 = arith.constant 0 : i32
    %c0_i32_1 = arith.constant 0 : i32
    return %c0_i32, %c0_i32_0 : i32, i32
  }
  func.func @transform_5(%arg0: i32) -> (i32, i32) {
    %c0_i32 = arith.constant 0 : i32
    %c0_i32_0 = arith.constant 0 : i32
    %c0_i32_1 = arith.constant 0 : i32
    return %c0_i32, %c0_i32_0 : i32, i32
  }
  func.func @transform_6(%arg0: i32) -> (i32, i32) {
    %c0_i32 = arith.constant 0 : i32
    %c0_i32_0 = arith.constant 0 : i32
    %c0_i32_1 = arith.constant 0 : i32
    return %c0_i32, %c0_i32_0 : i32, i32
  }
  func.func @transform_7(%arg0: i32) -> (i32, i32) {
    %c0_i32 = arith.constant 0 : i32
    %c0_i32_0 = arith.constant 0 : i32
    return %c0_i32, %arg0 : i32, i32
  }
}

</mosaic_0001>

<llo_original>
// kernel: q_model_forward.1
$region0: #{q_model_forward.1}
  #allocation0 [shape = 'u32[]', space=smem, size = 0x4, offset = 0x4, fixed_abs, tag = 'smem constant byte address 0x4 - core index']
  #allocation1 [shape = 'u32[144,128]{1,0:T(1,128)}', space=vmem, size = 0x12000, scoped, tag = 'internal scratch']
  %s0 = inlined_call_operand.vmem [shape: f32[1,128], index: 0, kind: input, shape index: {}]
  %s1 = inlined_call_operand.vmem [shape: f32[64,1], index: 1, kind: input, shape index: {}]
  %s2 = inlined_call_operand.vmem [shape: f32[64,1], index: 2, kind: input, shape index: {}]
  %s3 = inlined_call_operand.vmem [shape: f32[128,64], index: 3, kind: input, shape index: {}]
  %s4 = inlined_call_operand.vmem [shape: f32[128,1], index: 4, kind: input, shape index: {}]
  %s5 = inlined_call_operand.vmem [shape: f32[8,128], index: 5, kind: input, shape index: {}]
  %s6 = inlined_call_operand.vmem [shape: f32[8,1], index: 6, kind: input, shape index: {}]
  %s7 = inlined_call_operand.vmem [shape: f32[8,128], index: 7, kind: output, shape index: {}]
  %s8 = sld [smem:[#allocation0]]
  $region38: #{q_model_forward.1} parent=0
    _
  %s10 = ssub.s32 1, %s8
  %s11 = scalar_select 0, %s10, %s8
  // Predicated region
  $region2: #{q_model_forward.1} parent=0 // pred_check
    _
  $region3: #{q_model_forward.1} parent=0 // pred_check_branch
    %13 = sbr.rel (0) target = $region5
  $region4: #{q_model_forward.1} parent=0 // pred_region
    _
  $region5: #{q_model_forward.1} parent=0 // pred_fallthru
    _
  // Predicated region
  $region6: #{q_model_forward.1} parent=0 // pred_check
    _
  $region7: #{q_model_forward.1} parent=0 // pred_check_branch
    %15 = sbr.rel (0) target = $region9
  $region8: #{q_model_forward.1} parent=0 // pred_region
    _
  $region9: #{q_model_forward.1} parent=0 // pred_fallthru
    _
  // Predicated region
  $region10: #{q_model_forward.1} parent=0 // pred_check
    _
  $region11: #{q_model_forward.1} parent=0 // pred_check_branch
    %17 = sbr.rel (0) target = $region13
  $region12: #{q_model_forward.1} parent=0 // pred_region
    _
  $region13: #{q_model_forward.1} parent=0 // pred_fallthru
    _
  // Predicated region
  $region14: #{q_model_forward.1} parent=0 // pred_check
    _
  $region15: #{q_model_forward.1} parent=0 // pred_check_branch
    %19 = sbr.rel (0) target = $region17
  $region16: #{q_model_forward.1} parent=0 // pred_region
    _
  $region17: #{q_model_forward.1} parent=0 // pred_fallthru
    _
  // Predicated region
  $region18: #{q_model_forward.1} parent=0 // pred_check
    _
  $region19: #{q_model_forward.1} parent=0 // pred_check_branch
    %21 = sbr.rel (0) target = $region21
  $region20: #{q_model_forward.1} parent=0 // pred_region
    _
  $region21: #{q_model_forward.1} parent=0 // pred_fallthru
    _
  // Predicated region
  $region22: #{q_model_forward.1} parent=0 // pred_check
    _
  $region23: #{q_model_forward.1} parent=0 // pred_check_branch
    %23 = sbr.rel (0) target = $region25
  $region24: #{q_model_forward.1} parent=0 // pred_region
    _
  $region25: #{q_model_forward.1} parent=0 // pred_fallthru
    _
  // Predicated region
  $region26: #{q_model_forward.1} parent=0 // pred_check
    _
  $region27: #{q_model_forward.1} parent=0 // pred_check_branch
    %25 = sbr.rel (0) target = $region29
  $region28: #{q_model_forward.1} parent=0 // pred_region
    _
  $region29: #{q_model_forward.1} parent=0 // pred_fallthru
    _
  %v26 = vld [vmem:[%s0] sm:$0x1]
  %v27 = vld [vmem:[%s1] sm:$0xff]
  %v28 = vld [vmem:[%s1 + $0x8] sm:$0xff]
  %v29 = vld [vmem:[%s1 + $0x10] sm:$0xff]
  %v30 = vld [vmem:[%s1 + $0x18] sm:$0xff]
  %v31 = vld [vmem:[%s1 + $0x20] sm:$0xff]
  %v32 = vld [vmem:[%s1 + $0x28] sm:$0xff]
  %v33 = vld [vmem:[%s1 + $0x30] sm:$0xff]
  %v34 = vld [vmem:[%s1 + $0x38] sm:$0xff]
  %36 = vset.pattern.permute.xlu0 0
  %37 = vperm.xlu0 %36, %v27
  %v38 = vpop.permute.xlu0 %37
  %41 = vset.pattern.permute.xlu0 0
  %42 = vperm.xlu0 %41, %v28
  %v43 = vpop.permute.xlu0 %42
  %46 = vset.pattern.permute.xlu0 0
  %47 = vperm.xlu0 %46, %v29
  %v48 = vpop.permute.xlu0 %47
  %51 = vset.pattern.permute.xlu0 0
  %52 = vperm.xlu0 %51, %v30
  %v53 = vpop.permute.xlu0 %52
  %56 = vset.pattern.permute.xlu0 0
  %57 = vperm.xlu0 %56, %v31
  %v58 = vpop.permute.xlu0 %57
  %61 = vset.pattern.permute.xlu0 0
  %62 = vperm.xlu0 %61, %v32
  %v63 = vpop.permute.xlu0 %62
  %66 = vset.pattern.permute.xlu0 0
  %67 = vperm.xlu0 %66, %v33
  %v68 = vpop.permute.xlu0 %67
  %71 = vset.pattern.permute.xlu0 0
  %72 = vperm.xlu0 %71, %v34
  %v73 = vpop.permute.xlu0 %72
  %v76 = vlaneseq
  %v77 = vshrl.u32 %v76, 7
  %v78 = vsub.s32 0, %v77
  %v79 = vrot.slane %v26, %v78
  %v81 = vmul.f32 %v38, %v79
  %v82 = vmul.f32 %v43, %v79
  %v83 = vmul.f32 %v48, %v79
  %v84 = vmul.f32 %v53, %v79
  %v85 = vmul.f32 %v58, %v79
  %v86 = vmul.f32 %v63, %v79
  %v87 = vmul.f32 %v68, %v79
  %v88 = vmul.f32 %v73, %v79
  %v89 = vld [vmem:[%s2] sm:$0xff]
  %v90 = vld [vmem:[%s2 + $0x8] sm:$0xff]
  %v91 = vld [vmem:[%s2 + $0x10] sm:$0xff]
  %v92 = vld [vmem:[%s2 + $0x18] sm:$0xff]
  %v93 = vld [vmem:[%s2 + $0x20] sm:$0xff]
  %v94 = vld [vmem:[%s2 + $0x28] sm:$0xff]
  %v95 = vld [vmem:[%s2 + $0x30] sm:$0xff]
  %v96 = vld [vmem:[%s2 + $0x38] sm:$0xff]
  %98 = vset.pattern.permute.xlu0 0
  %99 = vperm.xlu0 %98, %v89
  %v100 = vpop.permute.xlu0 %99
  %103 = vset.pattern.permute.xlu0 0
  %104 = vperm.xlu0 %103, %v90
  %v105 = vpop.permute.xlu0 %104
  %108 = vset.pattern.permute.xlu0 0
  %109 = vperm.xlu0 %108, %v91
  %v110 = vpop.permute.xlu0 %109
  %113 = vset.pattern.permute.xlu0 0
  %114 = vperm.xlu0 %113, %v92
  %v115 = vpop.permute.xlu0 %114
  %118 = vset.pattern.permute.xlu0 0
  %119 = vperm.xlu0 %118, %v93
  %v120 = vpop.permute.xlu0 %119
  %123 = vset.pattern.permute.xlu0 0
  %124 = vperm.xlu0 %123, %v94
  %v125 = vpop.permute.xlu0 %124
  %128 = vset.pattern.permute.xlu0 0
  %129 = vperm.xlu0 %128, %v95
  %v130 = vpop.permute.xlu0 %129
  %133 = vset.pattern.permute.xlu0 0
  %134 = vperm.xlu0 %133, %v96
  %v135 = vpop.permute.xlu0 %134
  %v137 = vadd.f32 %v81, %v100
  %v138 = vadd.f32 %v82, %v105
  %v139 = vadd.f32 %v83, %v110
  %v140 = vadd.f32 %v84, %v115
  %v141 = vadd.f32 %v85, %v120
  %v142 = vadd.f32 %v86, %v125
  %v143 = vadd.f32 %v87, %v130
  %v144 = vadd.f32 %v88, %v135
  %v145 = vmax.f32 %v137, 0.0
  %v146 = vmax.f32 %v138, 0.0
  %v147 = vmax.f32 %v139, 0.0
  %v148 = vmax.f32 %v140, 0.0
  %v149 = vmax.f32 %v141, 0.0
  %v150 = vmax.f32 %v142, 0.0
  %v151 = vmax.f32 %v143, 0.0
  %v152 = vmax.f32 %v144, 0.0
  %v153 = vld [vmem:[%s3] sm:$0xff]
  %v154 = vld [vmem:[%s3 + $0x8] sm:$0xff]
  %v155 = vld [vmem:[%s3 + $0x10] sm:$0xff]
  %v156 = vld [vmem:[%s3 + $0x18] sm:$0xff]
  %v157 = vld [vmem:[%s3 + $0x20] sm:$0xff]
  %v158 = vld [vmem:[%s3 + $0x28] sm:$0xff]
  %v159 = vld [vmem:[%s3 + $0x30] sm:$0xff]
  %v160 = vld [vmem:[%s3 + $0x38] sm:$0xff]
  %v161 = vld [vmem:[%s3 + $0x40] sm:$0xff]
  %v162 = vld [vmem:[%s3 + $0x48] sm:$0xff]
  %v163 = vld [vmem:[%s3 + $0x50] sm:$0xff]
  %v164 = vld [vmem:[%s3 + $0x58] sm:$0xff]
  %v165 = vld [vmem:[%s3 + $0x60] sm:$0xff]
  %v166 = vld [vmem:[%s3 + $0x68] sm:$0xff]
  %v167 = vld [vmem:[%s3 + $0x70] sm:$0xff]
  %v168 = vld [vmem:[%s3 + $0x78] sm:$0xff]
  %v169 = vld [vmem:[%s4] sm:$0xff]
  %v170 = vld [vmem:[%s4 + $0x8] sm:$0xff]
  %v171 = vld [vmem:[%s4 + $0x10] sm:$0xff]
  %v172 = vld [vmem:[%s4 + $0x18] sm:$0xff]
  %v173 = vld [vmem:[%s4 + $0x20] sm:$0xff]
  %v174 = vld [vmem:[%s4 + $0x28] sm:$0xff]
  %v175 = vld [vmem:[%s4 + $0x30] sm:$0xff]
  %v176 = vld [vmem:[%s4 + $0x38] sm:$0xff]
  %v177 = vld [vmem:[%s4 + $0x40] sm:$0xff]
  %v178 = vld [vmem:[%s4 + $0x48] sm:$0xff]
  %v179 = vld [vmem:[%s4 + $0x50] sm:$0xff]
  %v180 = vld [vmem:[%s4 + $0x58] sm:$0xff]
  %v181 = vld [vmem:[%s4 + $0x60] sm:$0xff]
  %v182 = vld [vmem:[%s4 + $0x68] sm:$0xff]
  %v183 = vld [vmem:[%s4 + $0x70] sm:$0xff]
  %v184 = vld [vmem:[%s4 + $0x78] sm:$0xff]
  %186 = vset.pattern.permute.xlu0 0
  %187 = vperm.xlu0 %186, %v169
  %v188 = vpop.permute.xlu0 %187
  %191 = vset.pattern.permute.xlu0 0
  %192 = vperm.xlu0 %191, %v170
  %v193 = vpop.permute.xlu0 %192
  %196 = vset.pattern.permute.xlu0 0
  %197 = vperm.xlu0 %196, %v171
  %v198 = vpop.permute.xlu0 %197
  %201 = vset.pattern.permute.xlu0 0
  %202 = vperm.xlu0 %201, %v172
  %v203 = vpop.permute.xlu0 %202
  %206 = vset.pattern.permute.xlu0 0
  %207 = vperm.xlu0 %206, %v173
  %v208 = vpop.permute.xlu0 %207
  %211 = vset.pattern.permute.xlu0 0
  %212 = vperm.xlu0 %211, %v174
  %v213 = vpop.permute.xlu0 %212
  %216 = vset.pattern.permute.xlu0 0
  %217 = vperm.xlu0 %216, %v175
  %v218 = vpop.permute.xlu0 %217
  %221 = vset.pattern.permute.xlu0 0
  %222 = vperm.xlu0 %221, %v176
  %v223 = vpop.permute.xlu0 %222
  %226 = vset.pattern.permute.xlu0 0
  %227 = vperm.xlu0 %226, %v177
  %v228 = vpop.permute.xlu0 %227
  %231 = vset.pattern.permute.xlu0 0
  %232 = vperm.xlu0 %231, %v178
  %v233 = vpop.permute.xlu0 %232
  %236 = vset.pattern.permute.xlu0 0
  %237 = vperm.xlu0 %236, %v179
  %v238 = vpop.permute.xlu0 %237
  %241 = vset.pattern.permute.xlu0 0
  %242 = vperm.xlu0 %241, %v180
  %v243 = vpop.permute.xlu0 %242
  %246 = vset.pattern.permute.xlu0 0
  %247 = vperm.xlu0 %246, %v181
  %v248 = vpop.permute.xlu0 %247
  %251 = vset.pattern.permute.xlu0 0
  %252 = vperm.xlu0 %251, %v182
  %v253 = vpop.permute.xlu0 %252
  %256 = vset.pattern.permute.xlu0 0
  %257 = vperm.xlu0 %256, %v183
  %v258 = vpop.permute.xlu0 %257
  %261 = vset.pattern.permute.xlu0 0
  %262 = vperm.xlu0 %261, %v184
  %v263 = vpop.permute.xlu0 %262
  %vm265 = vcmask 523264
  %v267 = vsel %vm265, %v153, 0
  %v270 = vsel %vm265, %v154, 0
  %v273 = vsel %vm265, %v155, 0
  %v276 = vsel %vm265, %v156, 0
  %v279 = vsel %vm265, %v157, 0
  %v282 = vsel %vm265, %v158, 0
  %v285 = vsel %vm265, %v159, 0
  %v288 = vsel %vm265, %v160, 0
  %v291 = vsel %vm265, %v161, 0
  %v294 = vsel %vm265, %v162, 0
  %v297 = vsel %vm265, %v163, 0
  %v300 = vsel %vm265, %v164, 0
  %v303 = vsel %vm265, %v165, 0
  %v306 = vsel %vm265, %v166, 0
  %v309 = vsel %vm265, %v167, 0
  %v312 = vsel %vm265, %v168, 0
  %314 = vmatprep.subr.mxu0 0.0
  %315 = vmatpush1.msra.mxu0 0.0
  %316 = vmatprep.subr.mxu0 0.0
  %317 = vmatpush1.msra.mxu0 0.0
  %318 = vmatprep.subr.mxu0 0.0
  %319 = vmatpush1.msra.mxu0 0.0
  %320 = vmatprep.subr.mxu0 0.0
  %321 = vmatpush1.msra.mxu0 0.0
  %322 = vmatprep.subr.mxu0 0.0
  %323 = vmatpush1.msra.mxu0 0.0
  %324 = vmatprep.subr.mxu0 0.0
  %325 = vmatpush1.msra.mxu0 0.0
  %326 = vmatprep.subr.mxu0 0.0
  %327 = vmatpush1.msra.mxu0 0.0
  %328 = vmatprep.subr.mxu0 0.0
  %329 = vmatpush1.msra.mxu0 0.0
  %330 = vmatprep.subr.mxu0 0.0
  %331 = vmatpush1.msra.mxu0 %v152
  %332 = vmatprep.subr.mxu0 0.0
  %333 = vmatpush1.msra.mxu0 %v151
  %334 = vmatprep.subr.mxu0 0.0
  %335 = vmatpush1.msra.mxu0 %v150
  %336 = vmatprep.subr.mxu0 0.0
  %337 = vmatpush1.msra.mxu0 %v149
  %338 = vmatprep.subr.mxu0 0.0
  %339 = vmatpush1.msra.mxu0 %v148
  %340 = vmatprep.subr.mxu0 0.0
  %341 = vmatpush1.msra.mxu0 %v147
  %342 = vmatprep.subr.mxu0 0.0
  %343 = vmatpush1.msra.mxu0 %v146
  %344 = vmatprep.subr.mxu0 0.0
  %345 = vmatpush1.msra.mxu0 %v145
  %346 = vmatprep.subr.mxu0 0.0
  %347 = vmatpush2.msra.mxu0 0.0
  %348 = vmatprep.subr.mxu0 0.0
  %349 = vmatpush2.msra.mxu0 0.0
  %350 = vmatprep.subr.mxu0 0.0
  %351 = vmatpush2.msra.mxu0 0.0
  %352 = vmatprep.subr.mxu0 0.0
  %353 = vmatpush2.msra.mxu0 0.0
  %354 = vmatprep.subr.mxu0 0.0
  %355 = vmatpush2.msra.mxu0 0.0
  %356 = vmatprep.subr.mxu0 0.0
  %357 = vmatpush2.msra.mxu0 0.0
  %358 = vmatprep.subr.mxu0 0.0
  %359 = vmatpush2.msra.mxu0 0.0
  %360 = vmatprep.subr.mxu0 0.0
  %361 = vmatpush2.msra.mxu0 0.0
  %362 = vmatprep.subr.mxu0 0.0
  %363 = vmatpush2.msra.mxu0 0.0
  %364 = vmatprep.subr.mxu0 0.0
  %365 = vmatpush2.msra.mxu0 0.0
  %366 = vmatprep.subr.mxu0 0.0
  %367 = vmatpush2.msra.mxu0 0.0
  %368 = vmatprep.subr.mxu0 0.0
  %369 = vmatpush2.msra.mxu0 0.0
  %370 = vmatprep.subr.mxu0 0.0
  %371 = vmatpush2.msra.mxu0 0.0
  %372 = vmatprep.subr.mxu0 0.0
  %373 = vmatpush2.msra.mxu0 0.0
  %374 = vmatprep.subr.mxu0 0.0
  %375 = vmatpush2.msra.mxu0 0.0
  %376 = vmatprep.subr.mxu0 0.0
  %377 = vmatpush2.msra.mxu0 0.0
  %378 = vmatprep.mubr.f32.mxu0 0.0
  %379 = vmatmul.mubr.f32.gmra.mxu0 %v267
  %v380 = vpop.f32.mrf.mxu0
  %v381 = vadd.f32 %v188, %v380
  %v382 = vpop.f32.mrf.mxu0
  %383 = vmatprep.mubr.f32.mxu0 0.0
  %384 = vmatmul.mubr.f32.gmra.mxu0 %v270
  %v385 = vpop.f32.mrf.mxu0
  %v386 = vadd.f32 %v193, %v385
  %v387 = vpop.f32.mrf.mxu0
  %388 = vmatprep.mubr.f32.mxu0 0.0
  %389 = vmatmul.mubr.f32.gmra.mxu0 %v273
  %v390 = vpop.f32.mrf.mxu0
  %v391 = vadd.f32 %v198, %v390
  %v392 = vpop.f32.mrf.mxu0
  %393 = vmatprep.mubr.f32.mxu0 0.0
  %394 = vmatmul.mubr.f32.gmra.mxu0 %v276
  %v395 = vpop.f32.mrf.mxu0
  %v396 = vadd.f32 %v203, %v395
  %v397 = vpop.f32.mrf.mxu0
  %398 = vmatprep.mubr.f32.mxu0 0.0
  %399 = vmatmul.mubr.f32.gmra.mxu0 %v279
  %v400 = vpop.f32.mrf.mxu0
  %v401 = vadd.f32 %v208, %v400
  %v402 = vpop.f32.mrf.mxu0
  %403 = vmatprep.mubr.f32.mxu0 0.0
  %404 = vmatmul.mubr.f32.gmra.mxu0 %v282
  %v405 = vpop.f32.mrf.mxu0
  %v406 = vadd.f32 %v213, %v405
  %v407 = vpop.f32.mrf.mxu0
  %408 = vmatprep.mubr.f32.mxu0 0.0
  %409 = vmatmul.mubr.f32.gmra.mxu0 %v285
  %v410 = vpop.f32.mrf.mxu0
  %v411 = vadd.f32 %v218, %v410
  %v412 = vpop.f32.mrf.mxu0
  %413 = vmatprep.mubr.f32.mxu0 0.0
  %414 = vmatmul.mubr.f32.gmra.mxu0 %v288
  %v415 = vpop.f32.mrf.mxu0
  %v416 = vadd.f32 %v223, %v415
  %v417 = vpop.f32.mrf.mxu0
  %418 = vmatprep.mubr.f32.mxu0 0.0
  %419 = vmatmul.mubr.f32.gmra.mxu0 %v291
  %v420 = vpop.f32.mrf.mxu0
  %v421 = vadd.f32 %v228, %v420
  %v422 = vpop.f32.mrf.mxu0
  %423 = vmatprep.mubr.f32.mxu0 0.0
  %424 = vmatmul.mubr.f32.gmra.mxu0 %v294
  %v425 = vpop.f32.mrf.mxu0
  %v426 = vadd.f32 %v233, %v425
  %v427 = vpop.f32.mrf.mxu0
  %428 = vmatprep.mubr.f32.mxu0 0.0
  %429 = vmatmul.mubr.f32.gmra.mxu0 %v297
  %v430 = vpop.f32.mrf.mxu0
  %v431 = vadd.f32 %v238, %v430
  %v432 = vpop.f32.mrf.mxu0
  %433 = vmatprep.mubr.f32.mxu0 0.0
  %434 = vmatmul.mubr.f32.gmra.mxu0 %v300
  %v435 = vpop.f32.mrf.mxu0
  %v436 = vadd.f32 %v243, %v435
  %v437 = vpop.f32.mrf.mxu0
  %438 = vmatprep.mubr.f32.mxu0 0.0
  %439 = vmatmul.mubr.f32.gmra.mxu0 %v303
  %v440 = vpop.f32.mrf.mxu0
  %v441 = vadd.f32 %v248, %v440
  %v442 = vpop.f32.mrf.mxu0
  %443 = vmatprep.mubr.f32.mxu0 0.0
  %444 = vmatmul.mubr.f32.gmra.mxu0 %v306
  %v445 = vpop.f32.mrf.mxu0
  %v446 = vadd.f32 %v253, %v445
  %v447 = vpop.f32.mrf.mxu0
  %448 = vmatprep.mubr.f32.mxu0 0.0
  %449 = vmatmul.mubr.f32.gmra.mxu0 %v309
  %v450 = vpop.f32.mrf.mxu0
  %v451 = vadd.f32 %v258, %v450
  %v452 = vpop.f32.mrf.mxu0
  %453 = vmatprep.mubr.f32.mxu0 0.0
  %454 = vmatmul.mubr.f32.gmra.mxu0 %v312
  %v455 = vpop.f32.mrf.mxu0
  %v456 = vadd.f32 %v263, %v455
  %v457 = vpop.f32.mrf.mxu0
  %458 = vdwg.mxu0
  %v459 = vmax.f32 %v381, 0.0
  %v460 = vmax.f32 %v386, 0.0
  %v461 = vmax.f32 %v391, 0.0
  %v462 = vmax.f32 %v396, 0.0
  %v463 = vmax.f32 %v401, 0.0
  %v464 = vmax.f32 %v406, 0.0
  %v465 = vmax.f32 %v411, 0.0
  %v466 = vmax.f32 %v416, 0.0
  %v467 = vmax.f32 %v421, 0.0
  %v468 = vmax.f32 %v426, 0.0
  %v469 = vmax.f32 %v431, 0.0
  %v470 = vmax.f32 %v436, 0.0
  %v471 = vmax.f32 %v441, 0.0
  %v472 = vmax.f32 %v446, 0.0
  %v473 = vmax.f32 %v451, 0.0
  %v474 = vmax.f32 %v456, 0.0
  %v475 = vld [vmem:[%s5] sm:$0xff]
  %v476 = vld [vmem:[%s6] sm:$0xff]
  %478 = vset.pattern.permute.xlu0 0
  %479 = vperm.xlu0 %478, %v476
  %v480 = vpop.permute.xlu0 %479
  %482 = vmatprep.subr.mxu0 0.0
  %483 = vmatpush1.msra.mxu0 %v474
  %484 = vmatprep.subr.mxu0 0.0
  %485 = vmatpush1.msra.mxu0 %v473
  %486 = vmatprep.subr.mxu0 0.0
  %487 = vmatpush1.msra.mxu0 %v472
  %488 = vmatprep.subr.mxu0 0.0
  %489 = vmatpush1.msra.mxu0 %v471
  %490 = vmatprep.subr.mxu0 0.0
  %491 = vmatpush1.msra.mxu0 %v470
  %492 = vmatprep.subr.mxu0 0.0
  %493 = vmatpush1.msra.mxu0 %v469
  %494 = vmatprep.subr.mxu0 0.0
  %495 = vmatpush1.msra.mxu0 %v468
  %496 = vmatprep.subr.mxu0 0.0
  %497 = vmatpush1.msra.mxu0 %v467
  %498 = vmatprep.subr.mxu0 0.0
  %499 = vmatpush1.msra.mxu0 %v466
  %500 = vmatprep.subr.mxu0 0.0
  %501 = vmatpush1.msra.mxu0 %v465
  %502 = vmatprep.subr.mxu0 0.0
  %503 = vmatpush1.msra.mxu0 %v464
  %504 = vmatprep.subr.mxu0 0.0
  %505 = vmatpush1.msra.mxu0 %v463
  %506 = vmatprep.subr.mxu0 0.0
  %507 = vmatpush1.msra.mxu0 %v462
  %508 = vmatprep.subr.mxu0 0.0
  %509 = vmatpush1.msra.mxu0 %v461
  %510 = vmatprep.subr.mxu0 0.0
  %511 = vmatpush1.msra.mxu0 %v460
  %512 = vmatprep.subr.mxu0 0.0
  %513 = vmatpush1.msra.mxu0 %v459
  %514 = vmatprep.subr.mxu0 0.0
  %515 = vmatpush2.msra.mxu0 0.0
  %516 = vmatprep.subr.mxu0 0.0
  %517 = vmatpush2.msra.mxu0 0.0
  %518 = vmatprep.subr.mxu0 0.0
  %519 = vmatpush2.msra.mxu0 0.0
  %520 = vmatprep.subr.mxu0 0.0
  %521 = vmatpush2.msra.mxu0 0.0
  %522 = vmatprep.subr.mxu0 0.0
  %523 = vmatpush2.msra.mxu0 0.0
  %524 = vmatprep.subr.mxu0 0.0
  %525 = vmatpush2.msra.mxu0 0.0
  %526 = vmatprep.subr.mxu0 0.0
  %527 = vmatpush2.msra.mxu0 0.0
  %528 = vmatprep.subr.mxu0 0.0
  %529 = vmatpush2.msra.mxu0 0.0
  %530 = vmatprep.subr.mxu0 0.0
  %531 = vmatpush2.msra.mxu0 0.0
  %532 = vmatprep.subr.mxu0 0.0
  %533 = vmatpush2.msra.mxu0 0.0
  %534 = vmatprep.subr.mxu0 0.0
  %535 = vmatpush2.msra.mxu0 0.0
  %536 = vmatprep.subr.mxu0 0.0
  %537 = vmatpush2.msra.mxu0 0.0
  %538 = vmatprep.subr.mxu0 0.0
  %539 = vmatpush2.msra.mxu0 0.0
  %540 = vmatprep.subr.mxu0 0.0
  %541 = vmatpush2.msra.mxu0 0.0
  %542 = vmatprep.subr.mxu0 0.0
  %543 = vmatpush2.msra.mxu0 0.0
  %544 = vmatprep.subr.mxu0 0.0
  %545 = vmatpush2.msra.mxu0 0.0
  %546 = vmatprep.mubr.f32.mxu0 0.0
  %547 = vmatmul.mubr.f32.gmra.mxu0 %v475
  %v548 = vpop.f32.mrf.mxu0
  %v549 = vadd.f32 %v480, %v548
  %v550 = vpop.f32.mrf.mxu0
  %551 = vdwg.mxu0
  %552 = vst [vmem:[%s7] sm:$0xff] %v549
  // Predicated region
  $region30: #{q_model_forward.1} parent=0 // pred_check
    _
  $region31: #{q_model_forward.1} parent=0 // pred_check_branch
    %554 = sbr.rel (0) target = $region33
  $region32: #{q_model_forward.1} parent=0 // pred_region
    _
  $region33: #{q_model_forward.1} parent=0 // pred_fallthru
    _
  // Predicated region
  $region34: #{q_model_forward.1} parent=0 // pred_check
    _
  $region35: #{q_model_forward.1} parent=0 // pred_check_branch
    %556 = sbr.rel (0) target = $region37
  $region36: #{q_model_forward.1} parent=0 // pred_region
    _
  $region37: #{q_model_forward.1} parent=0 // pred_fallthru
    _

</llo_original>
